<compile_context>
chip_gen: v7x
topology: tpu7x:2x2x1
jax: 0.10.0
libtpu: 0.0.40
codegen_flags: <defaults>
</compile_context>

<pallas_src>
import functools

import jax
import jax.numpy as jnp
from jax.experimental import pallas as pl
from jax.experimental.pallas import tpu as pltpu


def _round_up(x, m):
    return (x + m - 1) // m * m


def _cdiv(a, b):
    return (a + b - 1) // b


# --------------------------------------------------------------------------
# Kernels
# --------------------------------------------------------------------------

def _generator_resident_kernel(x_ref, w_ref, b_ref, o_ref):
    # x_ref: (tm, d_model)  w_ref: (d_model, vocab)  b_ref: (1, vocab)
    # o_ref: (tm, vocab)
    x = x_ref[...].astype(w_ref.dtype)                 # in-kernel cast
    logits = jnp.dot(x, w_ref[...], preferred_element_type=jnp.float32)
    logits = logits + b_ref[...].astype(jnp.float32)   # broadcast over rows
    # Numerically stable log_softmax, single (tm, vocab) f32 temporary.
    m = jnp.max(logits, axis=-1, keepdims=True)
    lse = m + jnp.log(jnp.sum(jnp.exp(logits - m), axis=-1, keepdims=True))
    o_ref[...] = (logits - lse).astype(o_ref.dtype)


def _generator_tiled_kernel(x_ref, w_ref, b_ref, o_ref,
                            m_sc, s_sc, lse_sc, *, tv, vocab, mask_last):
    # grid = (row_tiles, 2, vocab_tiles)
    #   pass p==0: online logsumexp sweep over vocab tiles (no output writes)
    #   pass p==1: recompute logits per tile, write logits - lse
    p = pl.program_id(1)
    j = pl.program_id(2)
    nj = pl.num_programs(2)

    x = x_ref[...].astype(w_ref.dtype)
    logits = jnp.dot(x, w_ref[...], preferred_element_type=jnp.float32)
    logits = logits + b_ref[...].astype(jnp.float32)

    @pl.when(p == 0)
    def _():
        @pl.when(j == 0)
        def _():
            m_sc[...] = jnp.full(m_sc.shape, -jnp.inf, m_sc.dtype)
            s_sc[...] = jnp.zeros(s_sc.shape, s_sc.dtype)

        lg = logits
        if mask_last:  # static Python bool baked in via functools.partial
            col = j * tv + jax.lax.broadcasted_iota(jnp.int32, logits.shape, 1)
            lg = jnp.where(col < vocab, logits, -jnp.inf)

        m_prev = m_sc[...]
        m_new = jnp.maximum(m_prev, jnp.max(lg, axis=-1, keepdims=True))
        s_sc[...] = (s_sc[...] * jnp.exp(m_prev - m_new)
                     + jnp.sum(jnp.exp(lg - m_new), axis=-1, keepdims=True))
        m_sc[...] = m_new

        @pl.when(j == nj - 1)
        def _():
            lse_sc[...] = m_sc[...] + jnp.log(s_sc[...])

    @pl.when(p == 1)
    def _():
        o_ref[...] = (logits - lse_sc[...]).astype(o_ref.dtype)


# --------------------------------------------------------------------------
# Wrappers
# --------------------------------------------------------------------------

def prepare_generator_params(weight, bias, compute_dtype=jnp.bfloat16):
    """One-time parameter prep (hoists casts/transposes out of the forward).

    weight: (trg_vocab, d_model) — PyTorch nn.Linear.weight layout.
    bias:   (trg_vocab,)
    Returns (weight_t, bias_row): (d_model, trg_vocab) in compute_dtype and
    (1, trg_vocab) in f32.
    """
    weight_t = jnp.asarray(weight).T.astype(compute_dtype)
    bias_row = jnp.asarray(bias).reshape(1, -1).astype(jnp.float32)
    return weight_t, bias_row


def _vmem_budget_bytes():
    """Per-generation VMEM budget (leave compiler-scratch headroom)."""
    try:
        cap = int(pltpu.get_tpu_info().vmem_capacity_bytes)
    except Exception:
        cap = 64 * 2 ** 20          # conservative fallback (v7x per-core VMEM)
    return min(max(int(cap * 0.85), 32 * 2 ** 20), 112 * 2 ** 20)


def _single_buffered_spec(block_shape, index_map):
    """Grid-invariant block; single-buffer it when pipeline_mode is supported.

    Narrow feature probe (unsupported-argument error only) — not a broad
    except around the pallas_call.
    """
    try:
        return pl.BlockSpec(block_shape, index_map,
                            pipeline_mode=pl.Buffered(1))
    except (TypeError, AttributeError):
        return pl.BlockSpec(block_shape, index_map)


def generator_forward(x, weight_t, bias_row, *, tm=256, out_dtype=None,
                      force_tiled=False, tv=None):
    """log_softmax(x @ weight_t + bias_row, axis=-1).

    x:        (..., d_model), any float dtype (cast to weight_t.dtype in-kernel)
    weight_t: (d_model, vocab) pre-cast to the MXU compute dtype
    bias_row: (1, vocab) float32
    out_dtype: output dtype (default x.dtype; pass bfloat16 to halve writeback)
    """
    d_model, vocab = weight_t.shape
    assert x.shape[-1] == d_model
    assert bias_row.shape == (1, vocab)
    lead = x.shape[:-1]
    out_dtype = jnp.dtype(x.dtype if out_dtype is None else out_dtype)

    x2 = x.reshape(-1, d_model)
    M = x2.shape[0]

    x_item = jnp.dtype(x2.dtype).itemsize
    w_item = jnp.dtype(weight_t.dtype).itemsize
    o_item = out_dtype.itemsize

    budget = _vmem_budget_bytes()

    # Row tile: large enough to feed the MXU, small enough that the row grid
    # has >= ~4 steps (both v7x TCs busy, x/out DMA overlaps compute).
    tm_eff = max(8, min(_round_up(tm, 8), _round_up(_cdiv(M, 4), 8)))

    def resident_need(rows):
        # Conservative: assume the weight is double-buffered even if the
        # Buffered(1) hint is honored.
        return (2 * d_model * vocab * w_item        # resident weight
                + 2 * vocab * 4                     # bias
                + 2 * rows * d_model * x_item       # x tiles (double-buffered)
                + 2 * rows * vocab * o_item         # out tiles (double-buffered)
                + rows * vocab * 4                  # single f32 logits temp
                + (2 << 20))                        # slack

    use_tiled = bool(force_tiled)
    if not use_tiled and resident_need(tm_eff) > budget:
        rows = tm_eff
        while rows > 8 and resident_need(rows) > budget:
            rows = max(8, _round_up(rows // 2, 8))
        if resident_need(rows) <= budget:
            tm_eff = rows
        else:
            use_tiled = True

    if not use_tiled:
        # ---------------- resident-weight path ----------------
        grid = (_cdiv(M, tm_eff),)
        cost = pl.CostEstimate(
            flops=2 * M * d_model * vocab,
            transcendentals=M * vocab,
            bytes_accessed=(M * d_model * x_item + d_model * vocab * w_item
                            + vocab * 4 + M * vocab * o_item))
        out = pl.pallas_call(
            _generator_resident_kernel,
            out_shape=jax.ShapeDtypeStruct((M, vocab), out_dtype),
            grid_spec=pltpu.PrefetchScalarGridSpec(
                num_scalar_prefetch=0,
                grid=grid,
                in_specs=[
                    pl.BlockSpec((tm_eff, d_model), lambda i: (i, 0)),
                    _single_buffered_spec((d_model, vocab), lambda i: (0, 0)),
                    _single_buffered_spec((1, vocab), lambda i: (0, 0)),
                ],
                out_specs=pl.BlockSpec((tm_eff, vocab), lambda i: (i, 0)),
            ),
            compiler_params=pltpu.CompilerParams(
                dimension_semantics=("parallel",),
                vmem_limit_bytes=budget,
            ),
            cost_estimate=cost,
        )(x2, weight_t, bias_row)
        return out.reshape(*lead, vocab)

    # ---------------- vocab-tiled path (online logsumexp) ----------------
    tm_t = tm_eff

    def tiled_need(rows, cols):
        return (2 * d_model * cols * w_item         # weight tiles (dbl-buffered)
                + 2 * cols * 4                      # bias tiles
                + 2 * rows * d_model * x_item       # x tiles
                + 2 * rows * cols * o_item          # out tiles
                + rows * cols * 4                   # f32 logits temp
                + 3 * rows * 128 * 4                # m / s / lse scratch
                + (2 << 20))

    if tv is not None:
        tv_eff = max(128, _round_up(int(tv), 128))
    else:
        tv_eff = 128
        for cand in (4096, 2048, 1024, 512, 256, 128):
            if cand > _round_up(vocab, 128):
                continue
            if tiled_need(tm_t, cand) <= budget:
                tv_eff = cand
                break
    while tm_t > 8 and tiled_need(tm_t, tv_eff) > budget:
        tm_t = max(8, _round_up(tm_t // 2, 8))

    nj = _cdiv(vocab, tv_eff)
    mask_last = (vocab % tv_eff) != 0
    kernel = functools.partial(_generator_tiled_kernel, tv=tv_eff,
                               vocab=vocab, mask_last=mask_last)

    cost = pl.CostEstimate(
        flops=4 * M * d_model * vocab,              # logits recomputed in pass 1
        transcendentals=2 * M * vocab,
        bytes_accessed=(M * d_model * x_item
                        + 2 * _cdiv(M, tm_t) * d_model * vocab * w_item
                        + vocab * 4 + M * vocab * o_item))

    out = pl.pallas_call(
        kernel,
        out_shape=jax.ShapeDtypeStruct((M, vocab), out_dtype),
        grid_spec=pltpu.PrefetchScalarGridSpec(
            num_scalar_prefetch=0,
            grid=(_cdiv(M, tm_t), 2, nj),
            in_specs=[
                pl.BlockSpec((tm_t, d_model), lambda i, p, j: (i, 0)),
                pl.BlockSpec((d_model, tv_eff), lambda i, p, j: (0, j)),
                pl.BlockSpec((1, tv_eff), lambda i, p, j: (0, j)),
            ],
            # During the lse sweep (p == 0) nothing is written; park the output
            # window on block (i, 0) so no stale block gets flushed — it is
            # rewritten first thing in pass 1.
            out_specs=pl.BlockSpec((tm_t, tv_eff), lambda i, p, j: (i, j * p)),
            scratch_shapes=[pltpu.VMEM((tm_t, 1), jnp.float32),
                            pltpu.VMEM((tm_t, 1), jnp.float32),
                            pltpu.VMEM((tm_t, 1), jnp.float32)],
        ),
        compiler_params=pltpu.CompilerParams(
            dimension_semantics=("parallel", "arbitrary", "arbitrary"),
            vmem_limit_bytes=budget,
        ),
        cost_estimate=cost,
    )(x2, weight_t, bias_row)
    return out.reshape(*lead, vocab)


# --------------------------------------------------------------------------
# Self-test
# --------------------------------------------------------------------------

if __name__ == "__main__":
    batch, seq, d_model, trg_vocab = 2, 8, 32, 512

    key = jax.random.PRNGKey(0)
    kx, kw, kb, kx2 = jax.random.split(key, 4)

    # PyTorch nn.Linear layout / init bound.
    bound = 1.0 / (d_model ** 0.5)
    weight = jax.random.uniform(kw, (trg_vocab, d_model), jnp.float32,
                                minval=-bound, maxval=bound)
    bias = jax.random.uniform(kb, (trg_vocab,), jnp.float32,
                              minval=-bound, maxval=bound)
    x = jax.random.normal(kx, (batch, seq, d_model), jnp.float32)

    def reference(xx, ww, bb):
        logits = jnp.matmul(xx, ww.T,
                            precision=jax.lax.Precision.HIGHEST) + bb
        return jax.nn.log_softmax(logits, axis=-1)

    ref = reference(x, weight, bias)

    # 1) Default bf16-MXU resident-weight path.
    w_bf16, b_row = prepare_generator_params(weight, bias, jnp.bfloat16)
    out = generator_forward(x, w_bf16, b_row)
    jax.block_until_ready(out)
    assert out.shape == (batch, seq, trg_vocab)
    assert out.dtype == x.dtype
    ref_bf16 = jax.nn.log_softmax(
        jnp.dot(x.astype(jnp.bfloat16), w_bf16,
                preferred_element_type=jnp.float32) + bias, axis=-1)
    assert jnp.allclose(out, ref_bf16, atol=2e-3, rtol=2e-3), "bf16 path mismatch"
    assert jnp.allclose(out, ref, atol=5e-2), "bf16 path vs f32 module mismatch"

    # 2) f32-compute resident path.
    w_f32, b_row32 = prepare_generator_params(weight, bias, jnp.float32)
    out_f32 = generator_forward(x, w_f32, b_row32)
    jax.block_until_ready(out_f32)
    assert jnp.allclose(out_f32, ref, atol=1e-2), "f32 path mismatch"

    # 3) Ragged row count (no wrapper-side pad/slice any more).
    x_odd = jax.random.normal(kx2, (batch, 7, d_model), jnp.float32)
    out_odd = generator_forward(x_odd, w_f32, b_row32)
    jax.block_until_ready(out_odd)
    assert out_odd.shape == (batch, 7, trg_vocab)
    assert jnp.allclose(out_odd, reference(x_odd, weight, bias),
                        atol=1e-2), "ragged-rows mismatch"

    # 4) Forced vocab-tiled (online logsumexp) path.
    out_tiled = generator_forward(x, w_f32, b_row32, force_tiled=True, tv=128)
    jax.block_until_ready(out_tiled)
    assert jnp.allclose(out_tiled, ref, atol=1e-2), "tiled path mismatch"

    # 5) Tiled path with a ragged vocab tile (masked lse sweep).
    v2 = 384
    out_masked = generator_forward(x, w_f32[:, :v2], b_row32[:, :v2],
                                   force_tiled=True, tv=256)
    jax.block_until_ready(out_masked)
    ref_masked = jax.nn.log_softmax(
        jnp.matmul(x, w_f32[:, :v2], precision=jax.lax.Precision.HIGHEST)
        + bias[:v2], axis=-1)
    assert jnp.allclose(out_masked, ref_masked, atol=1e-2), "masked tiled mismatch"

    print("KERNEL_OK")
</pallas_src>

<mosaic_0001>
module attributes {stable_mosaic.version = 11 : i64} {
  func.func @_generator_resident_kernel(%arg0: i32, %arg1: memref<8x32xf32, #tpu.memory_space<vmem>>, %arg2: memref<32x512xbf16, #tpu.memory_space<vmem>>, %arg3: memref<1x512xf32, #tpu.memory_space<vmem>>, %arg4: memref<8x512xf32, #tpu.memory_space<vmem>>) attributes {dimension_semantics = [#tpu.dimension_semantics<parallel>], iteration_bounds = array<i64: 2>, scalar_prefetch = 0 : i64, scratch_operands = 0 : i64, tpu.core_type = #tpu.core_type<tc>, window_params = [{transform_indices = @transform_0, window_bounds = array<i64: 8, 32>}, {pipeline_mode = #tpu.pipeline_mode<synchronous>, transform_indices = @transform_1, window_bounds = array<i64: 32, 512>}, {pipeline_mode = #tpu.pipeline_mode<synchronous>, transform_indices = @transform_2, window_bounds = array<i64: 1, 512>}, {transform_indices = @transform_3, window_bounds = array<i64: 8, 512>}]} {
    %c0 = arith.constant 0 : index
    %c0_0 = arith.constant 0 : index
    %0 = vector.load %arg1[%c0, %c0_0] : memref<8x32xf32, #tpu.memory_space<vmem>>, vector<8x32xf32>
    %1 = arith.truncf %0 : vector<8x32xf32> to vector<8x32xbf16>
    %c0_1 = arith.constant 0 : index
    %c0_2 = arith.constant 0 : index
    %2 = vector.load %arg2[%c0_1, %c0_2] : memref<32x512xbf16, #tpu.memory_space<vmem>>, vector<32x512xbf16>
    %cst = arith.constant dense<0.000000e+00> : vector<8x512xf32>
    %3 = tpu.matmul %1, %2, %cst {dimension_numbers = #tpu.dot_dimension_numbers<[1], [0], [0], [1], [0, 0, 1, 1], [], []>} : vector<8x32xbf16>, vector<32x512xbf16>, vector<8x512xf32> -> vector<8x512xf32>
    %c0_3 = arith.constant 0 : index
    %c0_4 = arith.constant 0 : index
    %4 = vector.load %arg3[%c0_3, %c0_4] : memref<1x512xf32, #tpu.memory_space<vmem>>, vector<1x512xf32>
    %5 = vector.broadcast %4 : vector<1x512xf32> to vector<8x512xf32>
    %6 = arith.addf %3, %5 : vector<8x512xf32>
    %cst_5 = arith.constant dense<0xFF800000> : vector<8xf32>
    %7 = vector.multi_reduction <maximumf>, %6, %cst_5 [1] : vector<8x512xf32> to vector<8xf32>
    %8 = vector.shape_cast %7 : vector<8xf32> to vector<8x1xf32>
    %9 = vector.broadcast %8 : vector<8x1xf32> to vector<8x512xf32>
    %10 = arith.subf %6, %9 : vector<8x512xf32>
    %11 = math.exp %10 : vector<8x512xf32>
    %cst_6 = arith.constant dense<0.000000e+00> : vector<8xf32>
    %12 = vector.multi_reduction <add>, %11, %cst_6 [1] : vector<8x512xf32> to vector<8xf32>
    %13 = vector.shape_cast %12 : vector<8xf32> to vector<8x1xf32>
    %14 = math.log %13 : vector<8x1xf32>
    %15 = arith.addf %8, %14 : vector<8x1xf32>
    %16 = vector.broadcast %15 : vector<8x1xf32> to vector<8x512xf32>
    %17 = arith.subf %6, %16 : vector<8x512xf32>
    %c0_7 = arith.constant 0 : index
    %c0_8 = arith.constant 0 : index
    %18 = vector.load %arg4[%c0_7, %c0_8] : memref<8x512xf32, #tpu.memory_space<vmem>>, vector<8x512xf32>
    tpu.vector_store %arg4[%c0_7, %c0_8], %17 {strides = array<i32>} : memref<8x512xf32, #tpu.memory_space<vmem>>, vector<8x512xf32>,
    return
  }
  func.func @transform_0(%arg0: i32) -> (i32, i32) {
    %c0_i32 = arith.constant 0 : i32
    %c0_i32_0 = arith.constant 0 : i32
    return %arg0, %c0_i32 : i32, i32
  }
  func.func @transform_1(%arg0: i32) -> (i32, i32) {
    %c0_i32 = arith.constant 0 : i32
    %c0_i32_0 = arith.constant 0 : i32
    %c0_i32_1 = arith.constant 0 : i32
    return %c0_i32, %c0_i32_0 : i32, i32
  }
  func.func @transform_2(%arg0: i32) -> (i32, i32) {
    %c0_i32 = arith.constant 0 : i32
    %c0_i32_0 = arith.constant 0 : i32
    %c0_i32_1 = arith.constant 0 : i32
    return %c0_i32, %c0_i32_0 : i32, i32
  }
  func.func @transform_3(%arg0: i32) -> (i32, i32) {
    %c0_i32 = arith.constant 0 : i32
    %c0_i32_0 = arith.constant 0 : i32
    return %arg0, %c0_i32 : i32, i32
  }
}

</mosaic_0001>

<llo_original>
// kernel: tpu_custom_call.1
$region0: #{tpu_custom_call.1}
  #allocation0 [shape = 'u32[]', space=smem, size = 0x4, offset = 0x4, fixed_abs, tag = 'smem constant byte address 0x4 - core index']
  #allocation1 [shape = 'u32[144,128]{1,0:T(1,128)}', space=vmem, size = 0x12000, scoped, tag = 'internal scratch']
  %s0 = inlined_call_operand.hbm [shape: f32[16,32], index: 0, kind: input, shape index: {}]
  %s1 = inlined_call_operand.hbm [shape: bf16[32,512], index: 1, kind: input, shape index: {}]
  %s2 = inlined_call_operand.vmem [shape: f32[1,512], index: 2, kind: input, shape index: {}]
  %s3 = inlined_call_operand.hbm [shape: f32[16,512], index: 3, kind: output, shape index: {}]
  %s4 = sld [smem:[#allocation0]]
  $region53: #{tpu_custom_call.1} parent=0
    _
  %s6 = ssub.s32 1, %s4
  %s7 = scalar_select 0, %s6, %s4
  $region1: #{tpu_custom_call.1} parent=0
    #allocation2 [shape = 'u8[8192]{0}', space=vmem, size = 0x2000, scoped, tag = 'input window, operand 0']
    #allocation3 [shape = 's32[2]{0}', space=sflag, size = 0x8, scoped, tag = 'scoped memory for tpu_custom_call.1']
    #allocation4 [shape = 's32[2]{0}', space=sflag, size = 0x8, scoped, tag = 'scoped memory for tpu_custom_call.1']
    #allocation5 [shape = 'u8[32768]{0}', space=vmem, size = 0x8000, scoped, tag = 'input window, operand 1, single buffered']
    #allocation6 [shape = 's32[1]{0}', space=sflag, size = 0x4, scoped, tag = 'scoped memory for tpu_custom_call.1']
    #allocation7 [shape = 'u8[32768]{0}', space=vmem, size = 0x8000, scoped, tag = 'output window, operand 0']
    %8 = vsyncpa [#allocation3], 0
    %s9 = scalar_lea.sflag [#allocation3], 1
    %10 = vsyncpa %s9, 0
    %11 = vsyncpa [#allocation6], 0
    %12 = vsyncpa [#allocation4], 0
    %s13 = scalar_lea.sflag [#allocation4], 1
    %14 = vsyncpa %s13, 0
    loop: start=0, step=1, limit=4
    $region2: #{tpu_custom_call.1} parent=1 // loop_pre_header
      _
    $region3: #{tpu_custom_call.1} parent=1 // loop_header
      %s16 = sphi 0, %s20
      %p17 = scmp.ge.s32.totalorder %s16, 4
      %s26 = sphi 0, %s28
      %s29 = sphi 0, %s26
      %s30 = sphi 0, %s29
      %s46 = sphi 0, %s30
      %s50 = sphi 0, %s50
      %s52 = sphi 0, %s50
      %s53 = sphi 0, %s52
      %s67 = sphi 0, %s53
      %s71 = sphi 0, %s71
      %s73 = sphi 0, %s71
      %s74 = sphi 0, %s73
      %s88 = sphi 0, %s74
      %s94 = sphi 0, %s96
      %s97 = sphi 0, %s94
      %s98 = sphi 0, %s97
      %s114 = sphi 0, %s98
    $region4: #{tpu_custom_call.1} parent=1 // loop_header_branch
      %19 = sbr.rel (%p17) target = $region8
    $region5: #{tpu_custom_call.1} parent=1 // loop_body
      %s21 = ssub.s32 %s16, 1
      %s22 = ssub.s32 %s16, 2
      %s23 = sadd.s32 %s16, 1
      %s24 = ssub.s32 %s16, %s23
      %p25 = scmp.eq.s32.totalorder %s24, 0
      %s27 = sadd.s32 %s26, 1
      %s28 = scalar_select %p25, %s26, %s27
      %p31 = pneg %p25
      %p32 = scmp.eq.s32.totalorder %s16, 1
      %p33 = por %p31, %p32
      %p34 = scmp.ne.s32.totalorder %s26, %s29
      %p35 = scmp.eq.s32.totalorder %s16, 0
      %p36 = por %p34, %p35
      %p37 = scmp.ne.s32.totalorder %s26, %s29
      %p38 = scmp.eq.s32.totalorder %s21, 1
      %p39 = por %p37, %p38
      %p40 = scmp.ne.s32.totalorder %s29, %s30
      %p41 = scmp.eq.s32.totalorder %s21, 0
      %p42 = por %p40, %p41
      %p43 = scmp.ne.s32.totalorder %s29, %s30
      %p44 = scmp.eq.s32.totalorder %s22, 1
      %p45 = por %p43, %p44
      %p47 = scmp.ne.s32.totalorder %s30, %s46
      %p48 = scmp.eq.s32.totalorder %s22, 0
      %p49 = por %p47, %p48
      %s51 = sadd.s32 %s50, 1
      %p54 = scmp.eq.s32.totalorder %s16, 1
      %p55 = scmp.ne.s32.totalorder %s50, %s52
      %p56 = scmp.eq.s32.totalorder %s16, 0
      %p57 = por %p55, %p56
      %p58 = scmp.ne.s32.totalorder %s50, %s52
      %p59 = scmp.eq.s32.totalorder %s21, 1
      %p60 = por %p58, %p59
      %p61 = scmp.ne.s32.totalorder %s52, %s53
      %p62 = scmp.eq.s32.totalorder %s21, 0
      %p63 = por %p61, %p62
      %p64 = scmp.ne.s32.totalorder %s52, %s53
      %p65 = scmp.eq.s32.totalorder %s22, 1
      %p66 = por %p64, %p65
      %p68 = scmp.ne.s32.totalorder %s53, %s67
      %p69 = scmp.eq.s32.totalorder %s22, 0
      %p70 = por %p68, %p69
      %s72 = sadd.s32 %s71, 1
      %p75 = scmp.eq.s32.totalorder %s16, 1
      %p76 = scmp.ne.s32.totalorder %s71, %s73
      %p77 = scmp.eq.s32.totalorder %s16, 0
      %p78 = por %p76, %p77
      %p79 = scmp.ne.s32.totalorder %s71, %s73
      %p80 = scmp.eq.s32.totalorder %s21, 1
      %p81 = por %p79, %p80
      %p82 = scmp.ne.s32.totalorder %s73, %s74
      %p83 = scmp.eq.s32.totalorder %s21, 0
      %p84 = por %p82, %p83
      %p85 = scmp.ne.s32.totalorder %s73, %s74
      %p86 = scmp.eq.s32.totalorder %s22, 1
      %p87 = por %p85, %p86
      %p89 = scmp.ne.s32.totalorder %s74, %s88
      %p90 = scmp.eq.s32.totalorder %s22, 0
      %p91 = por %p89, %p90
      %s92 = ssub.s32 %s16, %s23
      %p93 = scmp.eq.s32.totalorder %s92, 0
      %s95 = sadd.s32 %s94, 1
      %s96 = scalar_select %p93, %s94, %s95
      %p99 = pneg %p93
      %p100 = scmp.eq.s32.totalorder %s16, 1
      %p101 = por %p99, %p100
      %p102 = scmp.ne.s32.totalorder %s94, %s97
      %p103 = scmp.eq.s32.totalorder %s16, 0
      %p104 = por %p102, %p103
      %p105 = scmp.ne.s32.totalorder %s94, %s97
      %p106 = scmp.eq.s32.totalorder %s21, 1
      %p107 = por %p105, %p106
      %p108 = scmp.ne.s32.totalorder %s97, %s98
      %p109 = scmp.eq.s32.totalorder %s21, 0
      %p110 = por %p108, %p109
      %p111 = scmp.ne.s32.totalorder %s97, %s98
      %p112 = scmp.eq.s32.totalorder %s22, 1
      %p113 = por %p111, %p112
      %p115 = scmp.ne.s32.totalorder %s98, %s114
      %p116 = scmp.eq.s32.totalorder %s22, 0
      %p117 = por %p115, %p116
      %p118 = scmp.le.s32.totalorder 1, %s16
      %p119 = scmp.lt.s32.totalorder %s16, 3
      %p120 = pnand %p118, %p119
      %p121 = pneg %p120
      // Predicated region
      $region9: #{tpu_custom_call.1} parent=5 // pred_check
        _
      $region10: #{tpu_custom_call.1} parent=5 // pred_check_branch
        %123 = sbr.rel (%p120) target = $region12
      $region11: #{tpu_custom_call.1} parent=5 // pred_region
        %s124 = ssub.s32 %s16, 1
        // Predicated region
        $region13: #{tpu_custom_call.1} parent=11 // pred_check
          %p125 = pneg %p63
        $region14: #{tpu_custom_call.1} parent=11 // pred_check_branch
          %127 = sbr.rel (%p125) target = $region16
        $region15: #{tpu_custom_call.1} parent=11 // pred_region
          %s129 = ssub.s32 1024, 1024
          %130 = vsyncadd [#allocation6], %s129
          %s131 = sshll.u32 [#allocation5], 4
          %s132 = int_to_ptr.vmem [resolvable:$true] %s131
          %137 = dma.hbm_to_vmem [thread:$0]  %s1, 1024, %s132, [#allocation6], 256, 256, 16
        $region16: #{tpu_custom_call.1} parent=11 // pred_fallthru
          _
        // Predicated region
        $region17: #{tpu_custom_call.1} parent=11 // pred_check
          %p138 = pneg %p84
        $region18: #{tpu_custom_call.1} parent=11 // pred_check_branch
          %140 = sbr.rel (%p138) target = $region20
        $region19: #{tpu_custom_call.1} parent=11 // pred_region
          _
        $region20: #{tpu_custom_call.1} parent=11 // pred_fallthru
          _
      $region12: #{tpu_custom_call.1} parent=5 // pred_fallthru
        _
      %p141 = scmp.lt.s32.totalorder %s16, 2
      // Predicated region
      $region21: #{tpu_custom_call.1} parent=5 // pred_check
        %p142 = pneg %p141
      $region22: #{tpu_custom_call.1} parent=5 // pred_check_branch
        %144 = sbr.rel (%p142) target = $region24
      $region23: #{tpu_custom_call.1} parent=5 // pred_region
        // Predicated region
        $region25: #{tpu_custom_call.1} parent=23 // pred_check
          %p145 = pneg %p36
        $region26: #{tpu_custom_call.1} parent=23 // pred_check_branch
          %147 = sbr.rel (%p145) target = $region28
        $region27: #{tpu_custom_call.1} parent=23 // pred_region
          %s148 = sand.u32 %s26, 1
          %s149 = scalar_lea.sflag [#allocation3], %s148
          %s150 = sand.u32 %s26, 1
          %s151 = smul.addr %s150, 8
          %s152 = scalar_lea.vmem [#allocation2], %s151
          %s154 = ssub.s32 128, 128
          %155 = vsyncadd %s149, %s154
          %s156 = smul.addr %s16, 128
          %s157 = scalar_lea.hbm %s0, %s156
          %s159 = sshll.u32 %s152, 4
          %s160 = int_to_ptr.vmem [resolvable:$true] %s159
          %162 = dma.hbm_to_vmem [thread:$0]  %s157, 128, %s160, %s149
        $region28: #{tpu_custom_call.1} parent=23 // pred_fallthru
          _
      $region24: #{tpu_custom_call.1} parent=5 // pred_fallthru
        _
      %p163 = scmp.le.s32.totalorder 1, %s16
      %p164 = scmp.lt.s32.totalorder %s16, 3
      %p165 = pnand %p163, %p164
      %p166 = pneg %p165
      // Predicated region
      $region29: #{tpu_custom_call.1} parent=5 // pred_check
        _
      $region30: #{tpu_custom_call.1} parent=5 // pred_check_branch
        %168 = sbr.rel (%p165) target = $region32
      $region31: #{tpu_custom_call.1} parent=5 // pred_region
        %s169 = ssub.s32 %s16, 1
        %s170 = sand.u32 %s29, 1
        %s171 = scalar_lea.sflag [#allocation3], %s170
        %s172 = sand.u32 %s29, 1
        %s173 = smul.addr %s172, 8
        %s174 = scalar_lea.vmem [#allocation2], %s173
        // Predicated region
        $region33: #{tpu_custom_call.1} parent=31 // pred_check
          %p175 = pneg %p42
        $region34: #{tpu_custom_call.1} parent=31 // pred_check_branch
          %177 = sbr.rel (%p175) target = $region36
        $region35: #{tpu_custom_call.1} parent=31 // pred_region
          %178 = dma.done %s171, 128
        $region36: #{tpu_custom_call.1} parent=31 // pred_fallthru
          _
        // Predicated region
        $region37: #{tpu_custom_call.1} parent=31 // pred_check
          %p179 = pneg %p63
        $region38: #{tpu_custom_call.1} parent=31 // pred_check_branch
          %181 = sbr.rel (%p179) target = $region40
        $region39: #{tpu_custom_call.1} parent=31 // pred_region
          %182 = dma.done [#allocation6], 1024
        $region40: #{tpu_custom_call.1} parent=31 // pred_fallthru
          _
        %s183 = sand.u32 %s29, 1
        %s184 = scalar_lea.sflag [#allocation3], %s183
        %s185 = sand.u32 %s29, 1
        %s186 = smul.addr %s185, 8
        %s187 = scalar_lea.vmem [#allocation2], %s186
        %p188 = pneg %p42
        %p189 = pneg %p39
        %p190 = pneg %p63
        %p191 = pneg %p60
        %p192 = pneg %p84
        %p193 = pneg %p81
        %p194 = pneg %p110
        %p195 = pneg %p107
        %s196 = sand.u32 %s97, 1
        %s197 = scalar_lea.sflag [#allocation4], %s196
        %s198 = sand.u32 %s97, 1
        %s199 = smul.addr %s198, 32
        %s200 = scalar_lea.vmem [#allocation7], %s199
        %v202 = vld [vmem:[%s174] sm:$0xff]
        %v203 = vpack.c.bf16 %v202, %v202
        %v204 = vld [vmem:[#allocation5] sm:$0xff]
        %v205 = vld [vmem:[#allocation5 + $0x8] sm:$0xff]
        %v206 = vld [vmem:[#allocation5 + $0x10] sm:$0xff]
        %v207 = vld [vmem:[#allocation5 + $0x18] sm:$0xff]
        %v208 = vld [vmem:[#allocation5 + $0x20] sm:$0xff]
        %v209 = vld [vmem:[#allocation5 + $0x28] sm:$0xff]
        %v210 = vld [vmem:[#allocation5 + $0x30] sm:$0xff]
        %v211 = vld [vmem:[#allocation5 + $0x38] sm:$0xff]
        %v212 = vld [vmem:[%s2] sm:$0xf]
        %v214 = vlaneseq
        %v215 = vshrl.u32 %v214, 7
        %v216 = vsub.s32 0, %v215
        %v217 = vrot.slane %v212, %v216
        %v218 = vlaneseq
        %v219 = vshrl.u32 %v218, 7
        %v220 = vsub.s32 1, %v219
        %v221 = vrot.slane %v212, %v220
        %v222 = vlaneseq
        %v223 = vshrl.u32 %v222, 7
        %v224 = vsub.s32 2, %v223
        %v225 = vrot.slane %v212, %v224
        %v226 = vlaneseq
        %v227 = vshrl.u32 %v226, 7
        %v228 = vsub.s32 3, %v227
        %v229 = vrot.slane %v212, %v228
        %v242 = vunpack.c.l.b16 %v204
        %v243 = vunpack.c.h.b16 %v204
        %v244 = vunpack.c.l.b16 %v205
        %v245 = vunpack.c.h.b16 %v205
        %v246 = vunpack.c.l.b16 %v206
        %v247 = vunpack.c.h.b16 %v206
        %v248 = vunpack.c.l.b16 %v207
        %v249 = vunpack.c.h.b16 %v207
        %v250 = vunpack.c.l.b16 %v208
        %v251 = vunpack.c.h.b16 %v208
        %v252 = vunpack.c.l.b16 %v209
        %v253 = vunpack.c.h.b16 %v209
        %v254 = vunpack.c.l.b16 %v210
        %v255 = vunpack.c.h.b16 %v210
        %v256 = vunpack.c.l.b16 %v211
        %v257 = vunpack.c.h.b16 %v211
        %v258 = vpack.c.b16 %v246, %v242
        %v259 = vpack.c.b16 %v247, %v243
        %v260 = vpack.c.b16 %v248, %v244
        %v261 = vpack.c.b16 %v249, %v245
        %v262 = vpack.c.b16 %v254, %v250
        %v263 = vpack.c.b16 %v255, %v251
        %v264 = vpack.c.b16 %v256, %v252
        %v265 = vpack.c.b16 %v257, %v253
        %vm274 = vcmask 261120
        %v276 = vsel %vm274, %v203, 0
        %278 = vmatprep.subr.bf16.mxu0 %v259
        %279 = vmatpush1.bf16.msra.mxu0 %v258
        %280 = vmatprep.subr.bf16.mxu0 %v263
        %281 = vmatpush1.bf16.msra.mxu0 %v262
        %282 = vmatprep.subr.bf16.mxu0 0
        %283 = vmatpush1.bf16.msra.mxu0 0
        %284 = vmatprep.subr.bf16.mxu0 0
        %285 = vmatpush1.bf16.msra.mxu0 0
        %286 = vmatprep.subr.bf16.mxu0 0
        %287 = vmatpush1.bf16.msra.mxu0 0
        %288 = vmatprep.subr.bf16.mxu0 0
        %289 = vmatpush1.bf16.msra.mxu0 0
        %290 = vmatprep.subr.bf16.mxu0 0
        %291 = vmatpush1.bf16.msra.mxu0 0
        %292 = vmatprep.subr.bf16.mxu0 0
        %293 = vmatpush1.bf16.msra.mxu0 0
        %294 = vmatprep.subr.bf16.mxu0 0
        %295 = vmatpush1.bf16.msra.mxu0 0
        %296 = vmatprep.subr.bf16.mxu0 0
        %297 = vmatpush1.bf16.msra.mxu0 0
        %298 = vmatprep.subr.bf16.mxu0 0
        %299 = vmatpush1.bf16.msra.mxu0 0
        %300 = vmatprep.subr.bf16.mxu0 0
        %301 = vmatpush1.bf16.msra.mxu0 0
        %302 = vmatprep.subr.bf16.mxu0 0
        %303 = vmatpush1.bf16.msra.mxu0 0
        %304 = vmatprep.subr.bf16.mxu0 0
        %305 = vmatpush1.bf16.msra.mxu0 0
        %306 = vmatprep.subr.bf16.mxu0 0
        %307 = vmatpush1.bf16.msra.mxu0 0
        %308 = vmatprep.subr.bf16.mxu0 0
        %309 = vmatpush1.bf16.msra.mxu0 0
        %310 = vmatprep.mubr.bf16.mxu0 0
        %311 = vmatmul.mubr.bf16.gmra.mrb[0].mxu0 %v276
        %v312 = vpop.f32.mrb[0].mxu0
        %v313 = vadd.f32 %v217, %v312
        %v314 = vpop.f32.mrb[0].mxu0
        %v315 = vadd.f32 %v221, %v314
        %v316 = vpop.f32.mrb[0].mxu0
        %v317 = vpop.f32.mrb[0].mxu0
        %318 = vdwg.mxu0
        %319 = vmatprep.subr.bf16.mxu0 %v261
        %320 = vmatpush1.bf16.msra.mxu0 %v260
        %321 = vmatprep.subr.bf16.mxu0 %v265
        %322 = vmatpush1.bf16.msra.mxu0 %v264
        %323 = vmatprep.subr.bf16.mxu0 0
        %324 = vmatpush1.bf16.msra.mxu0 0
        %325 = vmatprep.subr.bf16.mxu0 0
        %326 = vmatpush1.bf16.msra.mxu0 0
        %327 = vmatprep.subr.bf16.mxu0 0
        %328 = vmatpush1.bf16.msra.mxu0 0
        %329 = vmatprep.subr.bf16.mxu0 0
        %330 = vmatpush1.bf16.msra.mxu0 0
        %331 = vmatprep.subr.bf16.mxu0 0
        %332 = vmatpush1.bf16.msra.mxu0 0
        %333 = vmatprep.subr.bf16.mxu0 0
        %334 = vmatpush1.bf16.msra.mxu0 0
        %335 = vmatprep.subr.bf16.mxu0 0
        %336 = vmatpush1.bf16.msra.mxu0 0
        %337 = vmatprep.subr.bf16.mxu0 0
        %338 = vmatpush1.bf16.msra.mxu0 0
        %339 = vmatprep.subr.bf16.mxu0 0
        %340 = vmatpush1.bf16.msra.mxu0 0
        %341 = vmatprep.subr.bf16.mxu0 0
        %342 = vmatpush1.bf16.msra.mxu0 0
        %343 = vmatprep.subr.bf16.mxu0 0
        %344 = vmatpush1.bf16.msra.mxu0 0
        %345 = vmatprep.subr.bf16.mxu0 0
        %346 = vmatpush1.bf16.msra.mxu0 0
        %347 = vmatprep.subr.bf16.mxu0 0
        %348 = vmatpush1.bf16.msra.mxu0 0
        %349 = vmatprep.subr.bf16.mxu0 0
        %350 = vmatpush1.bf16.msra.mxu0 0
        %351 = vmatprep.mubr.bf16.mxu0 0
        %352 = vmatmul.mubr.bf16.gmra.mrb[0].mxu0 %v276
        %v353 = vpop.f32.mrb[0].mxu0
        %v354 = vadd.f32 %v225, %v353
        %v355 = vpop.f32.mrb[0].mxu0
        %v356 = vadd.f32 %v229, %v355
        %v357 = vpop.f32.mrb[0].mxu0
        %v358 = vpop.f32.mrb[0].mxu0
        %359 = vdwg.mxu0
        %v360 = vmax.f32 %v313, %v315
        %v361 = vmax.f32 %v354, %v356
        %v362 = vmax.f32 %v360, %v361
        %363 = vmax.xlane.f32.xlu0 %v362
        %v364 = vpop.xlane.xlu0 %363
        %v365 = vsub.f32 %v313, %v364
        %v366 = vsub.f32 %v315, %v364
        %v367 = vsub.f32 %v354, %v364
        %v368 = vsub.f32 %v356, %v364
        %v369 = vmul.f32 %v365, 1.442695
        %v370 = vpow.pop %v369
        %v371 = vmul.f32 %v366, 1.442695
        %v372 = vpow.pop %v371
        %v373 = vmul.f32 %v367, 1.442695
        %v374 = vpow.pop %v373
        %v375 = vmul.f32 %v368, 1.442695
        %v376 = vpow.pop %v375
        %v377 = vadd.f32 %v370, %v372
        %v378 = vadd.f32 %v377, %v374
        %v379 = vadd.f32 %v378, %v376
        %380 = vadd.xlane.f32.xlu0 %v379
        %v381 = vpop.xlane.xlu0 %380
        %v382 = vlog2.pop %v381
        %v383 = vmul.f32 %v382, 0.6931472
        %v384 = vadd.f32 %v364, %v383
        %v385 = vsub.f32 %v313, %v384
        %v386 = vsub.f32 %v315, %v384
        %v387 = vsub.f32 %v354, %v384
        %v388 = vsub.f32 %v356, %v384
        %389 = vst [vmem:[%s200] sm:$0xff] %v385
        %390 = vst [vmem:[%s200 + $0x8] sm:$0xff] %v386
        %391 = vst [vmem:[%s200 + $0x10] sm:$0xff] %v387
        %392 = vst [vmem:[%s200 + $0x18] sm:$0xff] %v388
        %s393 = sand.u32 %s97, 1
        %s394 = scalar_lea.sflag [#allocation4], %s393
        %s395 = sand.u32 %s97, 1
        %s396 = smul.addr %s395, 32
        %s397 = scalar_lea.vmem [#allocation7], %s396
        // Predicated region
        $region41: #{tpu_custom_call.1} parent=31 // pred_check
          %p398 = pneg %p107
        $region42: #{tpu_custom_call.1} parent=31 // pred_check_branch
          %400 = sbr.rel (%p398) target = $region44
        $region43: #{tpu_custom_call.1} parent=31 // pred_region
          %s402 = ssub.s32 512, 512
          %403 = vsyncadd %s394, %s402
          %s404 = smul.addr %s21, 4
          %s405 = smul.addr %s404, 128
          %s406 = scalar_lea.hbm %s3, %s405
          %s408 = sshll.u32 %s397, 4
          %s409 = int_to_ptr.vmem [resolvable:$true] %s408
          %411 = dma.vmem_to_hbm [thread:$0]  %s409, 512, %s406, %s394
        $region44: #{tpu_custom_call.1} parent=31 // pred_fallthru
          _
      $region32: #{tpu_custom_call.1} parent=5 // pred_fallthru
        _
      %p412 = scmp.le.s32.totalorder 2, %s16
      // Predicated region
      $region45: #{tpu_custom_call.1} parent=5 // pred_check
        %p413 = pneg %p412
      $region46: #{tpu_custom_call.1} parent=5 // pred_check_branch
        %415 = sbr.rel (%p413) target = $region48
      $region47: #{tpu_custom_call.1} parent=5 // pred_region
        %s416 = ssub.s32 %s16, 2
        // Predicated region
        $region49: #{tpu_custom_call.1} parent=47 // pred_check
          %p417 = pneg %p113
        $region50: #{tpu_custom_call.1} parent=47 // pred_check_branch
          %419 = sbr.rel (%p417) target = $region52
        $region51: #{tpu_custom_call.1} parent=47 // pred_region
          %s420 = sand.u32 %s98, 1
          %s421 = scalar_lea.sflag [#allocation4], %s420
          %s422 = sand.u32 %s98, 1
          %s423 = smul.addr %s422, 32
          %s424 = scalar_lea.vmem [#allocation7], %s423
          %425 = dma.done %s421, 512
        $region52: #{tpu_custom_call.1} parent=47 // pred_fallthru
          _
      $region48: #{tpu_custom_call.1} parent=5 // pred_fallthru
        _
    $region6: #{tpu_custom_call.1} parent=1 // loop_footer
      %s20 = sadd.s32 1, %s16
    $region7: #{tpu_custom_call.1} parent=1 // loop_footer_branch
      %15 = sbr.rel target = $region3
    $region8: #{tpu_custom_call.1} parent=1 // loop_exit
      _
    %426 = vsyncpa [#allocation3], 1
    %s427 = scalar_lea.sflag [#allocation3], 1
    %428 = vsyncpa %s427, 1
    %429 = vsyncpa [#allocation6], 1
    %430 = vsyncpa [#allocation4], 1
    %s431 = scalar_lea.sflag [#allocation4], 1
    %432 = vsyncpa %s431, 1

</llo_original>
